<compile_context>
chip_gen: v5e
topology: v5e:2x2
jax: 0.10.0
libtpu: 0.0.40
codegen_flags: <defaults>
</compile_context>

<pallas_src>
import functools

import jax
import jax.numpy as jnp
import numpy as np
from jax.experimental import pallas as pl
from jax.experimental.pallas import tpu as pltpu


# ----------------------------------------------------------------------------
# Kernel: one (batch, pixel-tile) grid cell.
#   o = W @ x_patch + bias
#   x_ref: (K, TP)      K = 4*C_in, TP pixels on the lane dim
#   w_ref: (C_out, K)   conv weight reshaped (order ci, kh, kw)
#   b_ref: (C_out, 1)   bias column (broadcast over pixels)
#   o_ref: (C_out, TP)
# ----------------------------------------------------------------------------
def downsample_conv_kernel(x_ref, w_ref, b_ref, o_ref):
    o_ref[...] = (
        jnp.dot(w_ref[...], x_ref[...], preferred_element_type=jnp.float32)
        + b_ref[...]
    ).astype(o_ref.dtype)


# ----------------------------------------------------------------------------
# Wrapper: layout plumbing (space-to-depth) + pallas_call.
# ----------------------------------------------------------------------------
def downsample_conv(x_nchw, weight, bias, *, tile_pixels=512):
    """PyTorch Conv2d(kernel=2, stride=2, padding=0, bias=True) forward."""
    B, C_in, H, W = x_nchw.shape
    C_out = weight.shape[0]
    Ho, Wo = H // 2, W // 2
    P = Ho * Wo
    K = 4 * C_in
    f32 = jnp.float32

    # space-to-depth: (B, C, H, W) -> (B, 4*C, Ho*Wo); patch-channel order is
    # (ci, kh, kw), matching weight.reshape(C_out, C_in*2*2).
    xp = x_nchw.reshape(B, C_in, Ho, 2, Wo, 2)
    xp = xp.transpose(0, 1, 3, 5, 2, 4).reshape(B, K, P).astype(f32)

    w_mat = weight.reshape(C_out, K).astype(f32)      # (C_out, 4*C_in)
    b_col = bias.reshape(C_out, 1).astype(f32)        # (C_out, 1)

    # Lane tile: multiple of 128 for big images, full image when small.
    # tile_pixels=512 keeps per-tile VMEM tiny (well under v7x's 32 MiB scoped
    # default even with double-buffering) while being lane-dense.
    TP = P if P <= tile_pixels else tile_pixels
    grid = (B, pl.cdiv(P, TP))

    out = pl.pallas_call(
        downsample_conv_kernel,
        out_shape=jax.ShapeDtypeStruct((B, C_out, P), f32),
        grid=grid,
        in_specs=[
            pl.BlockSpec((None, K, TP), lambda b, p: (b, 0, p)),   # patches
            pl.BlockSpec((C_out, K), lambda b, p: (0, 0)),         # weight
            pl.BlockSpec((C_out, 1), lambda b, p: (0, 0)),         # bias
        ],
        out_specs=pl.BlockSpec((None, C_out, TP), lambda b, p: (b, 0, p)),
        compiler_params=pltpu.CompilerParams(
            dimension_semantics=("parallel", "parallel")),
    )(xp, w_mat, b_col)

    return out.reshape(B, C_out, Ho, Wo)


# ----------------------------------------------------------------------------
# Pure-JAX reference (same math) for a correctness check.
# ----------------------------------------------------------------------------
def downsample_conv_reference(x_nchw, weight, bias):
    out = jax.lax.conv_general_dilated(
        x_nchw.astype(jnp.float32), weight.astype(jnp.float32),
        window_strides=(2, 2), padding="VALID",
        dimension_numbers=("NCHW", "OIHW", "NCHW"),
        precision=jax.lax.Precision.HIGHEST)
    return out + bias.reshape(1, -1, 1, 1).astype(jnp.float32)


if __name__ == "__main__":
    key = jax.random.PRNGKey(0)
    kx, kw, kb = jax.random.split(key, 3)

    B, C_in, H, W = 2, 4, 16, 16
    C_out = 32

    x = jax.random.normal(kx, (B, C_in, H, W), jnp.float32)
    weight = 0.05 * jax.random.normal(kw, (C_out, C_in, 2, 2), jnp.float32)
    bias = 0.01 * jax.random.normal(kb, (C_out,), jnp.float32)

    fwd = jax.jit(functools.partial(downsample_conv, tile_pixels=512))
    y = fwd(x, weight, bias)
    jax.block_until_ready(y)

    y_ref = downsample_conv_reference(x, weight, bias)
    assert y.shape == (B, C_out, H // 2, W // 2), y.shape
    np.testing.assert_allclose(np.asarray(y), np.asarray(y_ref),
                               atol=5e-3, rtol=5e-3)

    print("KERNEL_OK")
</pallas_src>

<mosaic_0001>
module attributes {stable_mosaic.version = 11 : i64} {
  func.func @downsample_conv_kernel(%arg0: i32, %arg1: i32, %arg2: memref<1x16x64xf32, #tpu.memory_space<vmem>>, %arg3: memref<32x16xf32, #tpu.memory_space<vmem>>, %arg4: memref<32x1xf32, #tpu.memory_space<vmem>>, %arg5: memref<1x32x64xf32, #tpu.memory_space<vmem>>) attributes {dimension_semantics = [#tpu.dimension_semantics<parallel>, #tpu.dimension_semantics<parallel>], iteration_bounds = array<i64: 2, 1>, scalar_prefetch = 0 : i64, scratch_operands = 0 : i64, tpu.core_type = #tpu.core_type<tc>, window_params = [{transform_indices = @transform_0, window_bounds = array<i64: 1, 16, 64>}, {pipeline_mode = #tpu.pipeline_mode<synchronous>, transform_indices = @transform_1, window_bounds = array<i64: 32, 16>}, {pipeline_mode = #tpu.pipeline_mode<synchronous>, transform_indices = @transform_2, window_bounds = array<i64: 32, 1>}, {transform_indices = @transform_3, window_bounds = array<i64: 1, 32, 64>}]} {
    %c0 = arith.constant 0 : index
    %c0_0 = arith.constant 0 : index
    %0 = vector.load %arg3[%c0, %c0_0] : memref<32x16xf32, #tpu.memory_space<vmem>>, vector<32x16xf32>
    %c0_1 = arith.constant 0 : index
    %c0_2 = arith.constant 0 : index
    %c0_3 = arith.constant 0 : index
    %1 = vector.load %arg2[%c0_1, %c0_2, %c0_3] : memref<1x16x64xf32, #tpu.memory_space<vmem>>, vector<1x16x64xf32>
    %2 = vector.shape_cast %1 : vector<1x16x64xf32> to vector<16x64xf32>
    %cst = arith.constant dense<0.000000e+00> : vector<32x64xf32>
    %3 = tpu.matmul %0, %2, %cst {dimension_numbers = #tpu.dot_dimension_numbers<[1], [0], [0], [1], [0, 0, 1, 1], [], []>} : vector<32x16xf32>, vector<16x64xf32>, vector<32x64xf32> -> vector<32x64xf32>
    %c0_4 = arith.constant 0 : index
    %c0_5 = arith.constant 0 : index
    %4 = vector.load %arg4[%c0_4, %c0_5] : memref<32x1xf32, #tpu.memory_space<vmem>>, vector<32x1xf32>
    %5 = vector.broadcast %4 : vector<32x1xf32> to vector<32x64xf32>
    %6 = arith.addf %3, %5 : vector<32x64xf32>
    %c0_6 = arith.constant 0 : index
    %c0_7 = arith.constant 0 : index
    %c0_8 = arith.constant 0 : index
    %7 = vector.load %arg5[%c0_6, %c0_7, %c0_8] : memref<1x32x64xf32, #tpu.memory_space<vmem>>, vector<1x32x64xf32>
    %8 = vector.shape_cast %7 : vector<1x32x64xf32> to vector<32x64xf32>
    %9 = vector.shape_cast %6 : vector<32x64xf32> to vector<1x32x64xf32>
    tpu.vector_store %arg5[%c0_6, %c0_7, %c0_8], %9 {strides = array<i32>} : memref<1x32x64xf32, #tpu.memory_space<vmem>>, vector<1x32x64xf32>,
    return
  }
  func.func @transform_0(%arg0: i32, %arg1: i32) -> (i32, i32, i32) {
    %c0_i32 = arith.constant 0 : i32
    %c0_i32_0 = arith.constant 0 : i32
    return %arg0, %c0_i32, %arg1 : i32, i32, i32
  }
  func.func @transform_1(%arg0: i32, %arg1: i32) -> (i32, i32) {
    %c0_i32 = arith.constant 0 : i32
    %c0_i32_0 = arith.constant 0 : i32
    %c0_i32_1 = arith.constant 0 : i32
    return %c0_i32, %c0_i32_0 : i32, i32
  }
  func.func @transform_2(%arg0: i32, %arg1: i32) -> (i32, i32) {
    %c0_i32 = arith.constant 0 : i32
    %c0_i32_0 = arith.constant 0 : i32
    %c0_i32_1 = arith.constant 0 : i32
    return %c0_i32, %c0_i32_0 : i32, i32
  }
  func.func @transform_3(%arg0: i32, %arg1: i32) -> (i32, i32, i32) {
    %c0_i32 = arith.constant 0 : i32
    %c0_i32_0 = arith.constant 0 : i32
    return %arg0, %c0_i32, %arg1 : i32, i32, i32
  }
}

</mosaic_0001>

<llo_original>
// kernel: downsample_conv.1
$region0: #{downsample_conv.1}
  #allocation0 [shape = 'u32[]', space=smem, size = 0x4, offset = 0x4, fixed_abs, tag = 'smem constant byte address 0x4 - core index']
  #allocation1 [shape = 'u32[72,128]{1,0:T(1,128)}', space=vmem, size = 0x9000, scoped, tag = 'internal scratch']
  %s0 = inlined_call_operand.vmem [shape: f32[2,16,64], index: 0, kind: input, shape index: {}]
  %s1 = inlined_call_operand.vmem [shape: f32[32,16], index: 1, kind: input, shape index: {}]
  %s2 = inlined_call_operand.vmem [shape: f32[32,1], index: 2, kind: input, shape index: {}]
  %s3 = inlined_call_operand.vmem [shape: f32[2,32,64], index: 3, kind: output, shape index: {}]
  %s4 = sld [smem:[#allocation0]]
  $region45: #{downsample_conv.1} parent=0
    _
  %s6 = ssub.s32 1, %s4
  %s7 = scalar_select 0, %s6, %s4
  loop: start=0, step=1, limit=4
  $region2: #{downsample_conv.1} parent=0 // loop_pre_header
    _
  $region3: #{downsample_conv.1} parent=0 // loop_header
    %s9 = sphi 0, %s13
    %p10 = scmp.ge.s32.totalorder %s9, 4
    %s16 = sphi 0, %s28
    %s17 = sphi 0, %s24
    %s18 = sphi 0, %s16
    %s19 = sphi 0, %s17
    %s20 = sphi 0, %s18
    %s21 = sphi 0, %s19
    %s33 = sphi 0, %s35
    %s36 = sphi 0, %s33
    %s37 = sphi 0, %s36
    %s53 = sphi 0, %s37
    %s57 = sphi 0, %s57
    %s59 = sphi 0, %s57
    %s60 = sphi 0, %s59
    %s74 = sphi 0, %s60
    %s78 = sphi 0, %s78
    %s80 = sphi 0, %s78
    %s81 = sphi 0, %s80
    %s95 = sphi 0, %s81
    %s103 = sphi 0, %s105
    %s106 = sphi 0, %s103
    %s107 = sphi 0, %s106
    %s123 = sphi 0, %s107
  $region4: #{downsample_conv.1} parent=0 // loop_header_branch
    %12 = sbr.rel (%p10) target = $region8
  $region5: #{downsample_conv.1} parent=0 // loop_body
    %s14 = ssub.s32 %s9, 1
    %s15 = ssub.s32 %s9, 2
    %s22 = sadd.s32 1, %s17
    %p23 = scmp.ge.s32.totalorder %s22, 1
    %s24 = scalar_select %p23, 0, %s22
    %s25 = sadd.s32 1, %s16
    %s26 = scalar_select %p23, %s25, %s16
    %p27 = scmp.ge.s32.totalorder %s26, 2
    %s28 = scalar_select %p27, 0, %s26
    %s29 = ssub.s32 %s16, %s28
    %s30 = ssub.s32 %s17, %s24
    %s31 = sor.u32 %s29, %s30
    %p32 = scmp.eq.s32.totalorder %s31, 0
    %s34 = sadd.s32 %s33, 1
    %s35 = scalar_select %p32, %s33, %s34
    %p38 = pneg %p32
    %p39 = scmp.eq.s32.totalorder %s9, 1
    %p40 = por %p38, %p39
    %p41 = scmp.ne.s32.totalorder %s33, %s36
    %p42 = scmp.eq.s32.totalorder %s9, 0
    %p43 = por %p41, %p42
    %p44 = scmp.ne.s32.totalorder %s33, %s36
    %p45 = scmp.eq.s32.totalorder %s14, 1
    %p46 = por %p44, %p45
    %p47 = scmp.ne.s32.totalorder %s36, %s37
    %p48 = scmp.eq.s32.totalorder %s14, 0
    %p49 = por %p47, %p48
    %p50 = scmp.ne.s32.totalorder %s36, %s37
    %p51 = scmp.eq.s32.totalorder %s15, 1
    %p52 = por %p50, %p51
    %p54 = scmp.ne.s32.totalorder %s37, %s53
    %p55 = scmp.eq.s32.totalorder %s15, 0
    %p56 = por %p54, %p55
    %s58 = sadd.s32 %s57, 1
    %p61 = scmp.eq.s32.totalorder %s9, 1
    %p62 = scmp.ne.s32.totalorder %s57, %s59
    %p63 = scmp.eq.s32.totalorder %s9, 0
    %p64 = por %p62, %p63
    %p65 = scmp.ne.s32.totalorder %s57, %s59
    %p66 = scmp.eq.s32.totalorder %s14, 1
    %p67 = por %p65, %p66
    %p68 = scmp.ne.s32.totalorder %s59, %s60
    %p69 = scmp.eq.s32.totalorder %s14, 0
    %p70 = por %p68, %p69
    %p71 = scmp.ne.s32.totalorder %s59, %s60
    %p72 = scmp.eq.s32.totalorder %s15, 1
    %p73 = por %p71, %p72
    %p75 = scmp.ne.s32.totalorder %s60, %s74
    %p76 = scmp.eq.s32.totalorder %s15, 0
    %p77 = por %p75, %p76
    %s79 = sadd.s32 %s78, 1
    %p82 = scmp.eq.s32.totalorder %s9, 1
    %p83 = scmp.ne.s32.totalorder %s78, %s80
    %p84 = scmp.eq.s32.totalorder %s9, 0
    %p85 = por %p83, %p84
    %p86 = scmp.ne.s32.totalorder %s78, %s80
    %p87 = scmp.eq.s32.totalorder %s14, 1
    %p88 = por %p86, %p87
    %p89 = scmp.ne.s32.totalorder %s80, %s81
    %p90 = scmp.eq.s32.totalorder %s14, 0
    %p91 = por %p89, %p90
    %p92 = scmp.ne.s32.totalorder %s80, %s81
    %p93 = scmp.eq.s32.totalorder %s15, 1
    %p94 = por %p92, %p93
    %p96 = scmp.ne.s32.totalorder %s81, %s95
    %p97 = scmp.eq.s32.totalorder %s15, 0
    %p98 = por %p96, %p97
    %s99 = ssub.s32 %s16, %s28
    %s100 = ssub.s32 %s17, %s24
    %s101 = sor.u32 %s99, %s100
    %p102 = scmp.eq.s32.totalorder %s101, 0
    %s104 = sadd.s32 %s103, 1
    %s105 = scalar_select %p102, %s103, %s104
    %p108 = pneg %p102
    %p109 = scmp.eq.s32.totalorder %s9, 1
    %p110 = por %p108, %p109
    %p111 = scmp.ne.s32.totalorder %s103, %s106
    %p112 = scmp.eq.s32.totalorder %s9, 0
    %p113 = por %p111, %p112
    %p114 = scmp.ne.s32.totalorder %s103, %s106
    %p115 = scmp.eq.s32.totalorder %s14, 1
    %p116 = por %p114, %p115
    %p117 = scmp.ne.s32.totalorder %s106, %s107
    %p118 = scmp.eq.s32.totalorder %s14, 0
    %p119 = por %p117, %p118
    %p120 = scmp.ne.s32.totalorder %s106, %s107
    %p121 = scmp.eq.s32.totalorder %s15, 1
    %p122 = por %p120, %p121
    %p124 = scmp.ne.s32.totalorder %s107, %s123
    %p125 = scmp.eq.s32.totalorder %s15, 0
    %p126 = por %p124, %p125
    %p127 = scmp.le.s32.totalorder 1, %s9
    %p128 = scmp.lt.s32.totalorder %s9, 3
    %p129 = pnand %p127, %p128
    %p130 = pneg %p129
    // Predicated region
    $region9: #{downsample_conv.1} parent=5 // pred_check
      _
    $region10: #{downsample_conv.1} parent=5 // pred_check_branch
      %132 = sbr.rel (%p129) target = $region12
    $region11: #{downsample_conv.1} parent=5 // pred_region
      %s133 = ssub.s32 %s9, 1
      // Predicated region
      $region13: #{downsample_conv.1} parent=11 // pred_check
        %p134 = pneg %p70
      $region14: #{downsample_conv.1} parent=11 // pred_check_branch
        %136 = sbr.rel (%p134) target = $region16
      $region15: #{downsample_conv.1} parent=11 // pred_region
        _
      $region16: #{downsample_conv.1} parent=11 // pred_fallthru
        _
      // Predicated region
      $region17: #{downsample_conv.1} parent=11 // pred_check
        %p137 = pneg %p91
      $region18: #{downsample_conv.1} parent=11 // pred_check_branch
        %139 = sbr.rel (%p137) target = $region20
      $region19: #{downsample_conv.1} parent=11 // pred_region
        _
      $region20: #{downsample_conv.1} parent=11 // pred_fallthru
        _
    $region12: #{downsample_conv.1} parent=5 // pred_fallthru
      _
    %p140 = scmp.lt.s32.totalorder %s9, 2
    // Predicated region
    $region21: #{downsample_conv.1} parent=5 // pred_check
      %p141 = pneg %p140
    $region22: #{downsample_conv.1} parent=5 // pred_check_branch
      %143 = sbr.rel (%p141) target = $region24
    $region23: #{downsample_conv.1} parent=5 // pred_region
      // Predicated region
      $region25: #{downsample_conv.1} parent=23 // pred_check
        %p144 = pneg %p43
      $region26: #{downsample_conv.1} parent=23 // pred_check_branch
        %146 = sbr.rel (%p144) target = $region28
      $region27: #{downsample_conv.1} parent=23 // pred_region
        %p147 = scmp.lt.s32.totalorder %s16, 1
        %s148 = scalar_select %p147, %s16, 1
        %p149 = scmp.lt.s32.totalorder %s17, 0
        %s150 = scalar_select %p149, %s17, 0
        %s151 = smul.addr %s148, 2
        %s152 = sadd.s32 %s150, %s151
        %s153 = smul.addr %s152, 8
        %s154 = scalar_lea.vmem %s0, %s153
      $region28: #{downsample_conv.1} parent=23 // pred_fallthru
        _
    $region24: #{downsample_conv.1} parent=5 // pred_fallthru
      _
    %p155 = scmp.le.s32.totalorder 1, %s9
    %p156 = scmp.lt.s32.totalorder %s9, 3
    %p157 = pnand %p155, %p156
    %p158 = pneg %p157
    // Predicated region
    $region29: #{downsample_conv.1} parent=5 // pred_check
      _
    $region30: #{downsample_conv.1} parent=5 // pred_check_branch
      %160 = sbr.rel (%p157) target = $region32
    $region31: #{downsample_conv.1} parent=5 // pred_region
      %s161 = ssub.s32 %s9, 1
      %p162 = scmp.lt.s32.totalorder %s18, 1
      %s163 = scalar_select %p162, %s18, 1
      %p164 = scmp.lt.s32.totalorder %s19, 0
      %s165 = scalar_select %p164, %s19, 0
      %s166 = smul.addr %s163, 2
      %s167 = sadd.s32 %s165, %s166
      %s168 = smul.addr %s167, 8
      %s169 = scalar_lea.vmem %s0, %s168
      %p170 = pneg %p49
      %p171 = pneg %p46
      %p172 = pneg %p70
      %p173 = pneg %p67
      %p174 = pneg %p91
      %p175 = pneg %p88
      %p176 = pneg %p119
      %p177 = pneg %p116
      %p178 = scmp.lt.s32.totalorder %s18, 1
      %s179 = scalar_select %p178, %s18, 1
      %p180 = scmp.lt.s32.totalorder %s19, 0
      %s181 = scalar_select %p180, %s19, 0
      %s182 = smul.addr %s179, 4
      %s183 = sadd.s32 %s181, %s182
      %s184 = smul.addr %s183, 8
      %s185 = scalar_lea.vmem %s3, %s184
      %p186 = scmp.lt.s32.totalorder %s18, 1
      %s187 = scalar_select %p186, %s18, 1
      %p188 = scmp.lt.s32.totalorder %s19, 0
      %s189 = scalar_select %p188, %s19, 0
      %s190 = smul.addr %s187, 2
      %s191 = sadd.s32 %s189, %s190
      %s192 = smul.addr %s191, 8
      %s193 = scalar_lea.vmem %s0, %s192
      %p194 = scmp.lt.s32.totalorder %s18, 1
      %s195 = scalar_select %p194, %s18, 1
      %p196 = scmp.lt.s32.totalorder %s19, 0
      %s197 = scalar_select %p196, %s19, 0
      %s198 = smul.addr %s195, 4
      %s199 = sadd.s32 %s197, %s198
      %s200 = smul.addr %s199, 8
      %s201 = scalar_lea.vmem %s3, %s200
      %v202 = vld [vmem:[%s1] sm:$0xff]
      %v203 = vld [vmem:[%s1 + $0x8] sm:$0xff]
      %v204 = vld [vmem:[%s1 + $0x10] sm:$0xff]
      %v205 = vld [vmem:[%s1 + $0x18] sm:$0xff]
      %v206 = vld [vmem:[%s193] sm:$0xff]
      %v207 = vld [vmem:[%s193 + $0x8] sm:$0xff]
      %v208 = vld [vmem:[%s2] sm:$0xff]
      %v209 = vld [vmem:[%s2 + $0x8] sm:$0xff]
      %v210 = vld [vmem:[%s2 + $0x10] sm:$0xff]
      %v211 = vld [vmem:[%s2 + $0x18] sm:$0xff]
      %213 = vset.pattern.permute.xlu0 0
      %214 = vperm.xlu0 %213, %v208
      %v215 = vpop.permute.xlu0 %214
      %218 = vset.pattern.permute.xlu0 0
      %219 = vperm.xlu0 %218, %v209
      %v220 = vpop.permute.xlu0 %219
      %223 = vset.pattern.permute.xlu0 0
      %224 = vperm.xlu0 %223, %v210
      %v225 = vpop.permute.xlu0 %224
      %228 = vset.pattern.permute.xlu0 0
      %229 = vperm.xlu0 %228, %v211
      %v230 = vpop.permute.xlu0 %229
      %vm232 = vcmask 130048
      %v234 = vsel %vm232, %v202, 0
      %v237 = vsel %vm232, %v203, 0
      %v240 = vsel %vm232, %v204, 0
      %v243 = vsel %vm232, %v205, 0
      %245 = vmatpush.msra.mxu0 0.0
      %246 = vmatpush.msra.mxu0 0.0
      %247 = vmatpush.msra.mxu0 0.0
      %248 = vmatpush.msra.mxu0 0.0
      %249 = vmatpush.msra.mxu0 0.0
      %250 = vmatpush.msra.mxu0 0.0
      %251 = vmatpush.msra.mxu0 0.0
      %252 = vmatpush.msra.mxu0 0.0
      %253 = vmatpush.msra.mxu0 0.0
      %254 = vmatpush.msra.mxu0 0.0
      %255 = vmatpush.msra.mxu0 0.0
      %256 = vmatpush.msra.mxu0 0.0
      %257 = vmatpush.msra.mxu0 0.0
      %258 = vmatpush.msra.mxu0 0.0
      %259 = vmatpush.msra.mxu0 %v207
      %260 = vmatpush.msra.mxu0 %v206
      %261 = vmatmul.f32.gmra.mxu0 %v234
      %v262 = vpop.f32.mrf.mxu0
      %v263 = vadd.f32 %v215, %v262
      %264 = vmatmul.f32.gmra.mxu0 %v237
      %v265 = vpop.f32.mrf.mxu0
      %v266 = vadd.f32 %v220, %v265
      %267 = vmatmul.f32.gmra.mxu0 %v240
      %v268 = vpop.f32.mrf.mxu0
      %v269 = vadd.f32 %v225, %v268
      %270 = vmatmul.f32.gmra.mxu0 %v243
      %v271 = vpop.f32.mrf.mxu0
      %v272 = vadd.f32 %v230, %v271
      %273 = vdwg.mxu0
      %vm274 = vcmask 523264
      %275 = vst.msk [vmem:[%s201] sm:$0xff] %vm274, %v263
      %276 = vst.msk [vmem:[%s201 + $0x8] sm:$0xff] %vm274, %v266
      %277 = vst.msk [vmem:[%s201 + $0x10] sm:$0xff] %vm274, %v269
      %278 = vst.msk [vmem:[%s201 + $0x18] sm:$0xff] %vm274, %v272
      %p279 = scmp.lt.s32.totalorder %s18, 1
      %s280 = scalar_select %p279, %s18, 1
      %p281 = scmp.lt.s32.totalorder %s19, 0
      %s282 = scalar_select %p281, %s19, 0
      %s283 = smul.addr %s280, 4
      %s284 = sadd.s32 %s282, %s283
      %s285 = smul.addr %s284, 8
      %s286 = scalar_lea.vmem %s3, %s285
      // Predicated region
      $region33: #{downsample_conv.1} parent=31 // pred_check
        %p287 = pneg %p116
      $region34: #{downsample_conv.1} parent=31 // pred_check_branch
        %289 = sbr.rel (%p287) target = $region36
      $region35: #{downsample_conv.1} parent=31 // pred_region
        _
      $region36: #{downsample_conv.1} parent=31 // pred_fallthru
        _
    $region32: #{downsample_conv.1} parent=5 // pred_fallthru
      _
    %p290 = scmp.le.s32.totalorder 2, %s9
    // Predicated region
    $region37: #{downsample_conv.1} parent=5 // pred_check
      %p291 = pneg %p290
    $region38: #{downsample_conv.1} parent=5 // pred_check_branch
      %293 = sbr.rel (%p291) target = $region40
    $region39: #{downsample_conv.1} parent=5 // pred_region
      %s294 = ssub.s32 %s9, 2
      // Predicated region
      $region41: #{downsample_conv.1} parent=39 // pred_check
        %p295 = pneg %p122
      $region42: #{downsample_conv.1} parent=39 // pred_check_branch
        %297 = sbr.rel (%p295) target = $region44
      $region43: #{downsample_conv.1} parent=39 // pred_region
        %p298 = scmp.lt.s32.totalorder %s20, 1
        %s299 = scalar_select %p298, %s20, 1
        %p300 = scmp.lt.s32.totalorder %s21, 0
        %s301 = scalar_select %p300, %s21, 0
        %s302 = smul.addr %s299, 4
        %s303 = sadd.s32 %s301, %s302
        %s304 = smul.addr %s303, 8
        %s305 = scalar_lea.vmem %s3, %s304
      $region44: #{downsample_conv.1} parent=39 // pred_fallthru
        _
    $region40: #{downsample_conv.1} parent=5 // pred_fallthru
      _
  $region6: #{downsample_conv.1} parent=0 // loop_footer
    %s13 = sadd.s32 1, %s9
  $region7: #{downsample_conv.1} parent=0 // loop_footer_branch
    %8 = sbr.rel target = $region3
  $region8: #{downsample_conv.1} parent=0 // loop_exit
    _

</llo_original>
